<compile_context>
chip_gen: v6e
topology: v6e:2x2x1
jax: 0.10.0
libtpu: 0.0.40
codegen_flags: <defaults>
</compile_context>

<pallas_src>
import functools

import jax
import jax.numpy as jnp
from jax.experimental import pallas as pl
from jax.experimental.pallas import tpu as pltpu


def _ewise_mul_kernel(p_ref, x_ref, o_ref):
    # Single VPU elementwise multiply over the current tile.
    o_ref[...] = p_ref[...] * x_ref[...]


@jax.jit
def ddp_comm_hook_forward(p, x):
    """Forward of TestDdpCommHook: elementwise p * x via one gridless whole-array Pallas call."""
    assert p.shape == x.shape and p.dtype == x.dtype  # module uses identical shapes
    return pl.pallas_call(
        _ewise_mul_kernel,
        out_shape=jax.ShapeDtypeStruct(x.shape, x.dtype),
        in_specs=[
            pl.BlockSpec(memory_space=pltpu.MemorySpace.VMEM),
            pl.BlockSpec(memory_space=pltpu.MemorySpace.VMEM),
        ],
        out_specs=pl.BlockSpec(memory_space=pltpu.MemorySpace.VMEM),
    )(p, x)


@functools.partial(jax.jit, static_argnames=("tile_rows",))
def ddp_bucket_forward(p_bucket, x_bucket, *, tile_rows=256):
    """Batched DDP-bucket variant: flat (rows, lanes) f32 slab, tiled & gridded, lane-dense.

    Tile = (tile_rows, lanes) with lanes a multiple of 128; 256x512 f32 = 512 KiB per buffer,
    so 3 arrays x 2 pipeline buffers = 3 MiB -- fits every generation's default scoped VMEM.
    Row axis is "parallel" so v7x splits the mem-bound slab across its 2 TensorCores.
    """
    rows, lanes = x_bucket.shape
    assert p_bucket.shape == x_bucket.shape and lanes % 128 == 0 and rows % tile_rows == 0
    spec = pl.BlockSpec((tile_rows, lanes), lambda i: (i, 0))
    return pl.pallas_call(
        _ewise_mul_kernel,
        out_shape=jax.ShapeDtypeStruct(x_bucket.shape, x_bucket.dtype),
        grid=(rows // tile_rows,),
        in_specs=[spec, spec],
        out_specs=spec,
        compiler_params=pltpu.CompilerParams(dimension_semantics=("parallel",)),
    )(p_bucket, x_bucket)


if __name__ == "__main__":
    key = jax.random.PRNGKey(0)
    kp, kx, kbp, kbx = jax.random.split(key, 4)

    # Parameter p mirrors nn.Parameter(torch.randn(40, 20)) -- deterministic init.
    p = jax.random.normal(kp, (40, 20), dtype=jnp.float32)
    x = jax.random.normal(kx, (40, 20), dtype=jnp.float32)

    out = ddp_comm_hook_forward(p, x)
    jax.block_until_ready(out)
    ref = p * x
    assert out.shape == (40, 20)
    assert jnp.allclose(out, ref, atol=1e-6, rtol=1e-6)

    # Small sanity check of the batched-bucket path (the real DDP-hook perf target).
    p_bucket = jax.random.normal(kbp, (1024, 512), dtype=jnp.float32)
    x_bucket = jax.random.normal(kbx, (1024, 512), dtype=jnp.float32)
    out_bucket = ddp_bucket_forward(p_bucket, x_bucket)
    jax.block_until_ready(out_bucket)
    assert jnp.allclose(out_bucket, p_bucket * x_bucket, atol=1e-6, rtol=1e-6)

    print("KERNEL_OK")
</pallas_src>

<mosaic_0001>
module attributes {stable_mosaic.version = 11 : i64} {
  func.func @_ewise_mul_kernel(%arg0: memref<40x20xf32, #tpu.memory_space<vmem>>, %arg1: memref<40x20xf32, #tpu.memory_space<vmem>>, %arg2: memref<40x20xf32, #tpu.memory_space<vmem>>) attributes {dimension_semantics = [], scalar_prefetch = 0 : i64, scratch_operands = 0 : i64, tpu.core_type = #tpu.core_type<tc>} {
    %c0 = arith.constant 0 : index
    %c0_0 = arith.constant 0 : index
    %0 = vector.load %arg0[%c0, %c0_0] : memref<40x20xf32, #tpu.memory_space<vmem>>, vector<40x20xf32>
    %c0_1 = arith.constant 0 : index
    %c0_2 = arith.constant 0 : index
    %1 = vector.load %arg1[%c0_1, %c0_2] : memref<40x20xf32, #tpu.memory_space<vmem>>, vector<40x20xf32>
    %2 = arith.mulf %0, %1 : vector<40x20xf32>
    %c0_3 = arith.constant 0 : index
    %c0_4 = arith.constant 0 : index
    %3 = vector.load %arg2[%c0_3, %c0_4] : memref<40x20xf32, #tpu.memory_space<vmem>>, vector<40x20xf32>
    tpu.vector_store %arg2[%c0_3, %c0_4], %2 {strides = array<i32>} : memref<40x20xf32, #tpu.memory_space<vmem>>, vector<40x20xf32>,
    return
  }
}

</mosaic_0001>

<llo_original>
// kernel: ddp_comm_hook_forward.1
$region0: #{ddp_comm_hook_forward.1}
  #allocation0 [shape = 'u32[]', space=smem, size = 0x4, offset = 0x4, fixed_abs, tag = 'smem constant byte address 0x4 - core index']
  #allocation1 [shape = 'u32[144,128]{1,0:T(1,128)}', space=vmem, size = 0x12000, scoped, tag = 'internal scratch']
  %s0 = inlined_call_operand.vmem [shape: f32[40,20], index: 0, kind: input, shape index: {}]
  %s1 = inlined_call_operand.vmem [shape: f32[40,20], index: 1, kind: input, shape index: {}]
  %s2 = inlined_call_operand.vmem [shape: f32[40,20], index: 2, kind: output, shape index: {}]
  %s3 = sld [smem:[#allocation0]]
  $region18: #{ddp_comm_hook_forward.1} parent=0
    _
  %s5 = ssub.s32 1, %s3
  %s6 = scalar_select 0, %s5, %s3
  // Predicated region
  $region2: #{ddp_comm_hook_forward.1} parent=0 // pred_check
    _
  $region3: #{ddp_comm_hook_forward.1} parent=0 // pred_check_branch
    %8 = sbr.rel (0) target = $region5
  $region4: #{ddp_comm_hook_forward.1} parent=0 // pred_region
    _
  $region5: #{ddp_comm_hook_forward.1} parent=0 // pred_fallthru
    _
  // Predicated region
  $region6: #{ddp_comm_hook_forward.1} parent=0 // pred_check
    _
  $region7: #{ddp_comm_hook_forward.1} parent=0 // pred_check_branch
    %10 = sbr.rel (0) target = $region9
  $region8: #{ddp_comm_hook_forward.1} parent=0 // pred_region
    _
  $region9: #{ddp_comm_hook_forward.1} parent=0 // pred_fallthru
    _
  %v11 = vld [vmem:[%s0] sm:$0xff]
  %v12 = vld [vmem:[%s0 + $0x8] sm:$0xff]
  %v13 = vld [vmem:[%s0 + $0x10] sm:$0xff]
  %v14 = vld [vmem:[%s0 + $0x18] sm:$0xff]
  %v15 = vld [vmem:[%s0 + $0x20] sm:$0xff]
  %v16 = vld [vmem:[%s1] sm:$0xff]
  %v17 = vld [vmem:[%s1 + $0x8] sm:$0xff]
  %v18 = vld [vmem:[%s1 + $0x10] sm:$0xff]
  %v19 = vld [vmem:[%s1 + $0x18] sm:$0xff]
  %v20 = vld [vmem:[%s1 + $0x20] sm:$0xff]
  %v21 = vmul.f32 %v11, %v16
  %v22 = vmul.f32 %v12, %v17
  %v23 = vmul.f32 %v13, %v18
  %v24 = vmul.f32 %v14, %v19
  %v25 = vmul.f32 %v15, %v20
  %vm26 = vcmask 162816
  %27 = vst.msk [vmem:[%s2] sm:$0xff] %vm26, %v21
  %28 = vst.msk [vmem:[%s2 + $0x8] sm:$0xff] %vm26, %v22
  %29 = vst.msk [vmem:[%s2 + $0x10] sm:$0xff] %vm26, %v23
  %30 = vst.msk [vmem:[%s2 + $0x18] sm:$0xff] %vm26, %v24
  %31 = vst.msk [vmem:[%s2 + $0x20] sm:$0xff] %vm26, %v25
  // Predicated region
  $region10: #{ddp_comm_hook_forward.1} parent=0 // pred_check
    _
  $region11: #{ddp_comm_hook_forward.1} parent=0 // pred_check_branch
    %33 = sbr.rel (0) target = $region13
  $region12: #{ddp_comm_hook_forward.1} parent=0 // pred_region
    _
  $region13: #{ddp_comm_hook_forward.1} parent=0 // pred_fallthru
    _
  // Predicated region
  $region14: #{ddp_comm_hook_forward.1} parent=0 // pred_check
    _
  $region15: #{ddp_comm_hook_forward.1} parent=0 // pred_check_branch
    %35 = sbr.rel (0) target = $region17
  $region16: #{ddp_comm_hook_forward.1} parent=0 // pred_region
    _
  $region17: #{ddp_comm_hook_forward.1} parent=0 // pred_fallthru
    _

</llo_original>
